<compile_context>
chip_gen: v7x
topology: tpu7x:2x2x1
jax: 0.10.0
libtpu: 0.0.40
codegen_flags: <defaults>
</compile_context>

<pallas_src>
import jax
import jax.numpy as jnp
from jax import lax
from jax.experimental import pallas as pl
from jax.experimental.pallas import tpu as pltpu


def _cdiv(a, b):
    return -(-a // b)


def _round_up(x, m):
    return ((x + m - 1) // m) * m


def _make_ccc_kernel(n_true, tn, td, tiles_per_split):
    """Kernel factory: closes over the true batch size and static tile geometry."""

    def kernel(x_ref, t_ref, cx_ref, ct_ref, sx_ref, st_ref, sqq_ref, sxt_ref):
        s = pl.program_id(0)          # N-split index ("parallel" megacore axis)
        n = pl.program_id(2)          # streamed N-tile ("arbitrary" reduction axis)

        # Fresh accumulators for every (split, feature-slab) pair.
        @pl.when(n == 0)
        def _():
            sx_ref[...] = jnp.zeros_like(sx_ref)
            st_ref[...] = jnp.zeros_like(st_ref)
            sqq_ref[...] = jnp.zeros_like(sqq_ref)
            sxt_ref[...] = jnp.zeros_like(sxt_ref)

        cx = cx_ref[...].astype(jnp.float32)     # (1, td) per-feature shift rows
        ct = ct_ref[...].astype(jnp.float32)

        def accumulate(x, t):
            # Row-sums broadcast over the 8 accumulator sublanes (all rows equal);
            # the wrapper reads row 0.  Keeps output blocks (8, 128)-aligned.
            sx_ref[...] += jnp.sum(x, axis=0, keepdims=True)
            st_ref[...] += jnp.sum(t, axis=0, keepdims=True)
            sqq_ref[...] += jnp.sum(x * x + t * t, axis=0, keepdims=True)
            sxt_ref[...] += jnp.sum(x * t, axis=0, keepdims=True)

        # Global row offset of this tile, from the UNCLAMPED tile index, so rows
        # past the true N are zeroed even when the DMA block index was clamped.
        row_start = (s * tiles_per_split + n) * tn
        tile_is_full = row_start + tn <= n_true

        @pl.when(tile_is_full)
        def _():
            accumulate(x_ref[...].astype(jnp.float32) - cx,
                       t_ref[...].astype(jnp.float32) - ct)

        @pl.when(jnp.logical_not(tile_is_full))
        def _():
            # Edge tiles contain garbage rows past N: mask before EVERY accumulate.
            rows = lax.broadcasted_iota(jnp.int32, (tn, td), 0) + row_start
            keep = rows < n_true
            accumulate(jnp.where(keep, x_ref[...].astype(jnp.float32) - cx, 0.0),
                       jnp.where(keep, t_ref[...].astype(jnp.float32) - ct, 0.0))

    return kernel


def concordance_cc(inputs, targets, *, tn_target=2048, td_target=512):
    """Pallas ConcordanceCC forward. inputs/targets: (N, D) float -> (D,) float32."""
    assert inputs.shape == targets.shape and inputs.ndim == 2
    N, D = inputs.shape
    assert N >= 2, "unbiased variance requires N >= 2 (same restriction as torch.var)"

    itemsize = jnp.dtype(inputs.dtype).itemsize
    sub = max(8, 32 // itemsize)                  # sublane packing: 8 f32 / 16 bf16 / 32 i8

    # ---- feature (lane) axis: multiples of 128, NO input padding.  Edge blocks of
    #      the last D slab read garbage lanes; they stay lane-isolated and are
    #      sliced off ([:D]) before any cross-lane reduce or division.
    d_pad128 = _round_up(D, 128)
    d_blocks = max(1, _cdiv(d_pad128, td_target))
    td = _round_up(_cdiv(d_pad128, d_blocks), 128)
    d_blocks = _cdiv(d_pad128, td)
    d_pad = td * d_blocks

    # ---- batch (sublane) axis: streamed reduction, optionally split in two for
    #      v7x megacore (harmless serialized loop on single-TC chips).
    n_blocks = max(1, _cdiv(N, tn_target))
    n_splits = 2 if n_blocks >= 2 else 1
    n_blocks = n_splits * _cdiv(n_blocks, n_splits)
    tn = _round_up(_cdiv(N, n_blocks), sub)
    tiles_per_split = n_blocks // n_splits
    n_valid_blocks = _cdiv(N, tn)                 # last block index with real rows

    def xt_index(s, d, n):
        # Clamp so the DMA never addresses a block fully past the array; the
        # in-kernel mask (based on the unclamped index) zeroes its contribution.
        blk = jnp.minimum(s * tiles_per_split + n, n_valid_blocks - 1)
        return (blk, d)

    def shift_index(s, d, n):
        return (0, d)

    def out_index(s, d, n):
        return (s, 0, d)

    # VMEM budget: 2 inputs x 2 buffers x tile, tiny shift rows, 4 outputs x 2
    # buffers x (8, td) f32, plus generous slack for compiler temporaries (f32
    # casts / products).  Capped at 48 MiB (safe on v7x's 64 MiB physical VMEM).
    in_bytes = 2 * 2 * tn * td * itemsize
    shift_bytes = 2 * 2 * td * itemsize
    out_bytes = 4 * 2 * 8 * td * 4
    slack = max(8 << 20, 4 * tn * td * 4)
    vmem_limit = int(min(48 << 20, in_bytes + shift_bytes + out_bytes + slack))

    kernel = _make_ccc_kernel(N, tn, td, tiles_per_split)

    # Per-feature shift rows (first sample of each array): numerically stabilizes
    # the one-pass raw moments; undone exactly in the wrapper.
    cx = inputs[0:1]
    ct = targets[0:1]

    out_sds = jax.ShapeDtypeStruct((n_splits, 8, d_pad), jnp.float32)
    sx_p, st_p, sqq_p, sxt_p = pl.pallas_call(
        kernel,
        out_shape=(out_sds, out_sds, out_sds, out_sds),
        grid_spec=pltpu.PrefetchScalarGridSpec(
            num_scalar_prefetch=0,
            grid=(n_splits, d_blocks, tiles_per_split),
            in_specs=[
                pl.BlockSpec((tn, td), xt_index),
                pl.BlockSpec((tn, td), xt_index),
                pl.BlockSpec((1, td), shift_index),
                pl.BlockSpec((1, td), shift_index),
            ],
            out_specs=[
                pl.BlockSpec((1, 8, td), out_index),
                pl.BlockSpec((1, 8, td), out_index),
                pl.BlockSpec((1, 8, td), out_index),
                pl.BlockSpec((1, 8, td), out_index),
            ],
        ),
        compiler_params=pltpu.CompilerParams(
            dimension_semantics=("parallel", "parallel", "arbitrary"),
            vmem_limit_bytes=vmem_limit,
        ),
    )(inputs, targets, cx, ct)

    # ---- O(D) combine + finalize in the wrapper (raw moments are additive over
    #      the N splits).  Slice [:D] BEFORE any cross-lane use so garbage lanes
    #      from D-edge blocks never reach the division (no inf/NaN possible).
    sx = jnp.sum(sx_p[:, 0, :], axis=0)[:D]
    st = jnp.sum(st_p[:, 0, :], axis=0)[:D]
    sqq = jnp.sum(sqq_p[:, 0, :], axis=0)[:D]
    sxt = jnp.sum(sxt_p[:, 0, :], axis=0)[:D]

    cx0 = inputs[0].astype(jnp.float32)
    ct0 = targets[0].astype(jnp.float32)

    inv_n = 1.0 / N
    pm_s = sx * inv_n                       # shifted pred mean
    gm_s = st * inv_n                       # shifted gt mean
    # pred_var + gt_var (unbiased); shift-invariant.
    var_sum = (sqq - sx * pm_s - st * gm_s) / (N - 1)
    # per-feature sum_n (x - pred_mean)(t - gt_mean); shift-invariant.
    cross = sxt - gm_s * sx
    mean_diff = (pm_s - gm_s) + (cx0 - ct0)   # undo shift for (pred_mean - gt_mean)
    denom = var_sum + mean_diff * mean_diff
    mean_cent_prod = jnp.sum(cross) / (N * D)
    return 1.0 - 2.0 * mean_cent_prod / denom


def _reference(inputs, targets):
    """Pure-JAX reference mirroring the PyTorch code exactly (two-pass centering)."""
    x = inputs.astype(jnp.float32)
    t = targets.astype(jnp.float32)
    n = x.shape[0]
    pred_mean = jnp.mean(x, axis=0)
    pred_var = jnp.sum((x - pred_mean) ** 2, axis=0) / (n - 1)
    gt_mean = jnp.mean(t, axis=0)
    gt_var = jnp.sum((t - gt_mean) ** 2, axis=0) / (n - 1)
    mean_cent_prod = jnp.mean((x - pred_mean) * (t - gt_mean))
    return 1 - 2 * mean_cent_prod / (pred_var + gt_var + (pred_mean - gt_mean) ** 2)


if __name__ == "__main__":
    key = jax.random.PRNGKey(0)
    k = jax.random.split(key, 10)

    # 1) Small exact-tile case (matches the module's (batch, features) usage).
    N, D = 32, 128
    x1 = jax.random.normal(k[0], (N, D), dtype=jnp.float32)
    t1 = 0.7 * x1 + 0.3 * jax.random.normal(k[1], (N, D), dtype=jnp.float32)
    out1 = jax.block_until_ready(concordance_cc(x1, t1))
    ref1 = jax.block_until_ready(_reference(x1, t1))
    assert out1.shape == (D,)
    assert jnp.allclose(out1, ref1, rtol=1e-4, atol=1e-4), (out1, ref1)

    # 2) Multi-tile: ragged last N tile (masked), N split across 2 cores, 3 D slabs.
    N2, D2 = 200, 384
    x2 = jax.random.normal(k[2], (N2, D2), dtype=jnp.float32) + 0.5
    t2 = 0.6 * x2 + 0.4 * jax.random.normal(k[3], (N2, D2), dtype=jnp.float32)
    out2 = jax.block_until_ready(concordance_cc(x2, t2, tn_target=64, td_target=128))
    ref2 = jax.block_until_ready(_reference(x2, t2))
    assert out2.shape == (D2,)
    assert jnp.allclose(out2, ref2, rtol=1e-4, atol=1e-4), (out2, ref2)

    # 3) Non-multiple-of-128 D (garbage lanes in the edge slab) plus a clamped,
    #    fully-masked tail tile in the second N split.
    N3, D3 = 66, 200
    x3 = jax.random.normal(k[4], (N3, D3), dtype=jnp.float32)
    t3 = 0.5 * x3 + 0.5 * jax.random.normal(k[5], (N3, D3), dtype=jnp.float32)
    out3 = jax.block_until_ready(concordance_cc(x3, t3, tn_target=8, td_target=128))
    ref3 = jax.block_until_ready(_reference(x3, t3))
    assert jnp.allclose(out3, ref3, rtol=1e-4, atol=1e-4), (out3, ref3)

    # 4) Large per-feature means: exercises the first-row shift that keeps the
    #    one-pass raw moments close to the two-pass reference in f32.
    N4, D4 = 256, 128
    x4 = 50.0 + jax.random.normal(k[6], (N4, D4), dtype=jnp.float32)
    t4 = 30.0 + 0.8 * (x4 - 50.0) + 0.6 * jax.random.normal(k[7], (N4, D4), dtype=jnp.float32)
    out4 = jax.block_until_ready(concordance_cc(x4, t4, tn_target=64))
    ref4 = jax.block_until_ready(_reference(x4, t4))
    assert jnp.allclose(out4, ref4, rtol=1e-4, atol=1e-4), (out4, ref4)

    # 5) bf16 inputs (halved HBM traffic; tn rounds to the 16-row bf16 packing).
    x5 = jax.random.normal(k[8], (64, 256), dtype=jnp.float32)
    t5 = 0.7 * x5 + 0.3 * jax.random.normal(k[9], (64, 256), dtype=jnp.float32)
    out5 = jax.block_until_ready(
        concordance_cc(x5.astype(jnp.bfloat16), t5.astype(jnp.bfloat16)))
    ref5 = jax.block_until_ready(
        _reference(x5.astype(jnp.bfloat16), t5.astype(jnp.bfloat16)))
    assert jnp.allclose(out5, ref5, rtol=1e-3, atol=1e-3), (out5, ref5)

    print("KERNEL_OK")
</pallas_src>

<mosaic_0001>
module attributes {stable_mosaic.version = 11 : i64} {
  func.func @kernel(%arg0: i32, %arg1: i32, %arg2: i32, %arg3: memref<32x128xf32, #tpu.memory_space<vmem>>, %arg4: memref<32x128xf32, #tpu.memory_space<vmem>>, %arg5: memref<1x128xf32, #tpu.memory_space<vmem>>, %arg6: memref<1x128xf32, #tpu.memory_space<vmem>>, %arg7: memref<1x8x128xf32, #tpu.memory_space<vmem>>, %arg8: memref<1x8x128xf32, #tpu.memory_space<vmem>>, %arg9: memref<1x8x128xf32, #tpu.memory_space<vmem>>, %arg10: memref<1x8x128xf32, #tpu.memory_space<vmem>>) attributes {dimension_semantics = [#tpu.dimension_semantics<parallel>, #tpu.dimension_semantics<parallel>, #tpu.dimension_semantics<arbitrary>], iteration_bounds = array<i64: 1, 1, 1>, scalar_prefetch = 0 : i64, scratch_operands = 0 : i64, tpu.core_type = #tpu.core_type<tc>, window_params = [{transform_indices = @transform_0, window_bounds = array<i64: 32, 128>}, {transform_indices = @transform_1, window_bounds = array<i64: 32, 128>}, {transform_indices = @transform_2, window_bounds = array<i64: 1, 128>}, {transform_indices = @transform_3, window_bounds = array<i64: 1, 128>}, {transform_indices = @transform_4, window_bounds = array<i64: 1, 8, 128>}, {transform_indices = @transform_5, window_bounds = array<i64: 1, 8, 128>}, {transform_indices = @transform_6, window_bounds = array<i64: 1, 8, 128>}, {transform_indices = @transform_7, window_bounds = array<i64: 1, 8, 128>}]} {
    %c0_i32 = arith.constant 0 : i32
    %0 = arith.cmpi eq, %arg2, %c0_i32 : i32
    %1 = arith.extui %0 : i1 to i32
    %c0_i32_0 = arith.constant 0 : i32
    %2 = arith.cmpi ne, %1, %c0_i32_0 : i32
    scf.if %2 {
      %cst = arith.constant 0.000000e+00 : f32
      %15 = vector.broadcast %cst : f32 to vector<1x8x128xf32>
      %c0_8 = arith.constant 0 : index
      %c0_9 = arith.constant 0 : index
      %c0_10 = arith.constant 0 : index
      %16 = vector.load %arg7[%c0_8, %c0_9, %c0_10] : memref<1x8x128xf32, #tpu.memory_space<vmem>>, vector<1x8x128xf32>
      tpu.vector_store %arg7[%c0_8, %c0_9, %c0_10], %15 {strides = array<i32>} : memref<1x8x128xf32, #tpu.memory_space<vmem>>, vector<1x8x128xf32>,
      %cst_11 = arith.constant 0.000000e+00 : f32
      %17 = vector.broadcast %cst_11 : f32 to vector<1x8x128xf32>
      %c0_12 = arith.constant 0 : index
      %c0_13 = arith.constant 0 : index
      %c0_14 = arith.constant 0 : index
      %18 = vector.load %arg8[%c0_12, %c0_13, %c0_14] : memref<1x8x128xf32, #tpu.memory_space<vmem>>, vector<1x8x128xf32>
      tpu.vector_store %arg8[%c0_12, %c0_13, %c0_14], %17 {strides = array<i32>} : memref<1x8x128xf32, #tpu.memory_space<vmem>>, vector<1x8x128xf32>,
      %cst_15 = arith.constant 0.000000e+00 : f32
      %19 = vector.broadcast %cst_15 : f32 to vector<1x8x128xf32>
      %c0_16 = arith.constant 0 : index
      %c0_17 = arith.constant 0 : index
      %c0_18 = arith.constant 0 : index
      %20 = vector.load %arg9[%c0_16, %c0_17, %c0_18] : memref<1x8x128xf32, #tpu.memory_space<vmem>>, vector<1x8x128xf32>
      tpu.vector_store %arg9[%c0_16, %c0_17, %c0_18], %19 {strides = array<i32>} : memref<1x8x128xf32, #tpu.memory_space<vmem>>, vector<1x8x128xf32>,
      %cst_19 = arith.constant 0.000000e+00 : f32
      %21 = vector.broadcast %cst_19 : f32 to vector<1x8x128xf32>
      %c0_20 = arith.constant 0 : index
      %c0_21 = arith.constant 0 : index
      %c0_22 = arith.constant 0 : index
      %22 = vector.load %arg10[%c0_20, %c0_21, %c0_22] : memref<1x8x128xf32, #tpu.memory_space<vmem>>, vector<1x8x128xf32>
      tpu.vector_store %arg10[%c0_20, %c0_21, %c0_22], %21 {strides = array<i32>} : memref<1x8x128xf32, #tpu.memory_space<vmem>>, vector<1x8x128xf32>,
    } else {
    }
    %c0 = arith.constant 0 : index
    %c0_1 = arith.constant 0 : index
    %3 = vector.load %arg5[%c0, %c0_1] : memref<1x128xf32, #tpu.memory_space<vmem>>, vector<1x128xf32>
    %c0_2 = arith.constant 0 : index
    %c0_3 = arith.constant 0 : index
    %4 = vector.load %arg6[%c0_2, %c0_3] : memref<1x128xf32, #tpu.memory_space<vmem>>, vector<1x128xf32>
    %c1_i32 = arith.constant 1 : i32
    %5 = arith.muli %arg0, %c1_i32 : i32
    %6 = arith.addi %5, %arg2 : i32
    %c32_i32 = arith.constant 32 : i32
    %7 = arith.muli %6, %c32_i32 : i32
    %c32_i32_4 = arith.constant 32 : i32
    %8 = arith.addi %7, %c32_i32_4 : i32
    %c32_i32_5 = arith.constant 32 : i32
    %9 = arith.cmpi sle, %8, %c32_i32_5 : i32
    %10 = arith.extui %9 : i1 to i32
    %c0_i32_6 = arith.constant 0 : i32
    %11 = arith.cmpi ne, %10, %c0_i32_6 : i32
    scf.if %11 {
      %c0_8 = arith.constant 0 : index
      %c0_9 = arith.constant 0 : index
      %15 = vector.load %arg3[%c0_8, %c0_9] : memref<32x128xf32, #tpu.memory_space<vmem>>, vector<32x128xf32>
      %16 = vector.broadcast %3 : vector<1x128xf32> to vector<32x128xf32>
      %17 = arith.subf %15, %16 : vector<32x128xf32>
      %c0_10 = arith.constant 0 : index
      %c0_11 = arith.constant 0 : index
      %18 = vector.load %arg4[%c0_10, %c0_11] : memref<32x128xf32, #tpu.memory_space<vmem>>, vector<32x128xf32>
      %19 = vector.broadcast %4 : vector<1x128xf32> to vector<32x128xf32>
      %20 = arith.subf %18, %19 : vector<32x128xf32>
      %c0_12 = arith.constant 0 : index
      %c0_13 = arith.constant 0 : index
      %c0_14 = arith.constant 0 : index
      %21 = vector.load %arg7[%c0_12, %c0_13, %c0_14] : memref<1x8x128xf32, #tpu.memory_space<vmem>>, vector<1x8x128xf32>
      %cst = arith.constant dense<0.000000e+00> : vector<128xf32>
      %22 = vector.multi_reduction <add>, %17, %cst [0] : vector<32x128xf32> to vector<128xf32>
      %23 = vector.shape_cast %22 : vector<128xf32> to vector<1x128xf32>
      %24 = vector.shape_cast %23 : vector<1x128xf32> to vector<1x1x128xf32>
      %25 = vector.broadcast %24 : vector<1x1x128xf32> to vector<1x8x128xf32>
      %26 = arith.addf %21, %25 : vector<1x8x128xf32>
      %c0_15 = arith.constant 0 : index
      %c0_16 = arith.constant 0 : index
      %c0_17 = arith.constant 0 : index
      %27 = vector.load %arg7[%c0_15, %c0_16, %c0_17] : memref<1x8x128xf32, #tpu.memory_space<vmem>>, vector<1x8x128xf32>
      tpu.vector_store %arg7[%c0_15, %c0_16, %c0_17], %26 {strides = array<i32>} : memref<1x8x128xf32, #tpu.memory_space<vmem>>, vector<1x8x128xf32>,
      %c0_18 = arith.constant 0 : index
      %c0_19 = arith.constant 0 : index
      %c0_20 = arith.constant 0 : index
      %28 = vector.load %arg8[%c0_18, %c0_19, %c0_20] : memref<1x8x128xf32, #tpu.memory_space<vmem>>, vector<1x8x128xf32>
      %cst_21 = arith.constant dense<0.000000e+00> : vector<128xf32>
      %29 = vector.multi_reduction <add>, %20, %cst_21 [0] : vector<32x128xf32> to vector<128xf32>
      %30 = vector.shape_cast %29 : vector<128xf32> to vector<1x128xf32>
      %31 = vector.shape_cast %30 : vector<1x128xf32> to vector<1x1x128xf32>
      %32 = vector.broadcast %31 : vector<1x1x128xf32> to vector<1x8x128xf32>
      %33 = arith.addf %28, %32 : vector<1x8x128xf32>
      %c0_22 = arith.constant 0 : index
      %c0_23 = arith.constant 0 : index
      %c0_24 = arith.constant 0 : index
      %34 = vector.load %arg8[%c0_22, %c0_23, %c0_24] : memref<1x8x128xf32, #tpu.memory_space<vmem>>, vector<1x8x128xf32>
      tpu.vector_store %arg8[%c0_22, %c0_23, %c0_24], %33 {strides = array<i32>} : memref<1x8x128xf32, #tpu.memory_space<vmem>>, vector<1x8x128xf32>,
      %c0_25 = arith.constant 0 : index
      %c0_26 = arith.constant 0 : index
      %c0_27 = arith.constant 0 : index
      %35 = vector.load %arg9[%c0_25, %c0_26, %c0_27] : memref<1x8x128xf32, #tpu.memory_space<vmem>>, vector<1x8x128xf32>
      %36 = arith.mulf %17, %17 : vector<32x128xf32>
      %37 = arith.mulf %20, %20 : vector<32x128xf32>
      %38 = arith.addf %36, %37 : vector<32x128xf32>
      %cst_28 = arith.constant dense<0.000000e+00> : vector<128xf32>
      %39 = vector.multi_reduction <add>, %38, %cst_28 [0] : vector<32x128xf32> to vector<128xf32>
      %40 = vector.shape_cast %39 : vector<128xf32> to vector<1x128xf32>
      %41 = vector.shape_cast %40 : vector<1x128xf32> to vector<1x1x128xf32>
      %42 = vector.broadcast %41 : vector<1x1x128xf32> to vector<1x8x128xf32>
      %43 = arith.addf %35, %42 : vector<1x8x128xf32>
      %c0_29 = arith.constant 0 : index
      %c0_30 = arith.constant 0 : index
      %c0_31 = arith.constant 0 : index
      %44 = vector.load %arg9[%c0_29, %c0_30, %c0_31] : memref<1x8x128xf32, #tpu.memory_space<vmem>>, vector<1x8x128xf32>
      tpu.vector_store %arg9[%c0_29, %c0_30, %c0_31], %43 {strides = array<i32>} : memref<1x8x128xf32, #tpu.memory_space<vmem>>, vector<1x8x128xf32>,
      %c0_32 = arith.constant 0 : index
      %c0_33 = arith.constant 0 : index
      %c0_34 = arith.constant 0 : index
      %45 = vector.load %arg10[%c0_32, %c0_33, %c0_34] : memref<1x8x128xf32, #tpu.memory_space<vmem>>, vector<1x8x128xf32>
      %46 = arith.mulf %17, %20 : vector<32x128xf32>
      %cst_35 = arith.constant dense<0.000000e+00> : vector<128xf32>
      %47 = vector.multi_reduction <add>, %46, %cst_35 [0] : vector<32x128xf32> to vector<128xf32>
      %48 = vector.shape_cast %47 : vector<128xf32> to vector<1x128xf32>
      %49 = vector.shape_cast %48 : vector<1x128xf32> to vector<1x1x128xf32>
      %50 = vector.broadcast %49 : vector<1x1x128xf32> to vector<1x8x128xf32>
      %51 = arith.addf %45, %50 : vector<1x8x128xf32>
      %c0_36 = arith.constant 0 : index
      %c0_37 = arith.constant 0 : index
      %c0_38 = arith.constant 0 : index
      %52 = vector.load %arg10[%c0_36, %c0_37, %c0_38] : memref<1x8x128xf32, #tpu.memory_space<vmem>>, vector<1x8x128xf32>
      tpu.vector_store %arg10[%c0_36, %c0_37, %c0_38], %51 {strides = array<i32>} : memref<1x8x128xf32, #tpu.memory_space<vmem>>, vector<1x8x128xf32>,
    } else {
    }
    %true = arith.constant true
    %12 = arith.xori %9, %true : i1
    %13 = arith.extui %12 : i1 to i32
    %c0_i32_7 = arith.constant 0 : i32
    %14 = arith.cmpi ne, %13, %c0_i32_7 : i32
    scf.if %14 {
      %15 = tpu.iota {dimensions = array<i32: 0>} : vector<32x128xi32>
      %16 = vector.broadcast %7 : i32 to vector<32x128xi32>
      %17 = arith.addi %15, %16 : vector<32x128xi32>
      %c32_i32_8 = arith.constant 32 : i32
      %18 = vector.broadcast %c32_i32_8 : i32 to vector<32x128xi32>
      %19 = arith.cmpi slt, %17, %18 : vector<32x128xi32>
      %c0_9 = arith.constant 0 : index
      %c0_10 = arith.constant 0 : index
      %20 = vector.load %arg3[%c0_9, %c0_10] : memref<32x128xf32, #tpu.memory_space<vmem>>, vector<32x128xf32>
      %21 = vector.broadcast %3 : vector<1x128xf32> to vector<32x128xf32>
      %22 = arith.subf %20, %21 : vector<32x128xf32>
      %cst = arith.constant 0.000000e+00 : f32
      %23 = vector.broadcast %cst : f32 to vector<32x128xf32>
      %24 = arith.select %19, %22, %23 : vector<32x128xi1>, vector<32x128xf32>
      %c0_11 = arith.constant 0 : index
      %c0_12 = arith.constant 0 : index
      %25 = vector.load %arg4[%c0_11, %c0_12] : memref<32x128xf32, #tpu.memory_space<vmem>>, vector<32x128xf32>
      %26 = vector.broadcast %4 : vector<1x128xf32> to vector<32x128xf32>
      %27 = arith.subf %25, %26 : vector<32x128xf32>
      %cst_13 = arith.constant 0.000000e+00 : f32
      %28 = vector.broadcast %cst_13 : f32 to vector<32x128xf32>
      %29 = arith.select %19, %27, %28 : vector<32x128xi1>, vector<32x128xf32>
      %c0_14 = arith.constant 0 : index
      %c0_15 = arith.constant 0 : index
      %c0_16 = arith.constant 0 : index
      %30 = vector.load %arg7[%c0_14, %c0_15, %c0_16] : memref<1x8x128xf32, #tpu.memory_space<vmem>>, vector<1x8x128xf32>
      %cst_17 = arith.constant dense<0.000000e+00> : vector<128xf32>
      %31 = vector.multi_reduction <add>, %24, %cst_17 [0] : vector<32x128xf32> to vector<128xf32>
      %32 = vector.shape_cast %31 : vector<128xf32> to vector<1x128xf32>
      %33 = vector.shape_cast %32 : vector<1x128xf32> to vector<1x1x128xf32>
      %34 = vector.broadcast %33 : vector<1x1x128xf32> to vector<1x8x128xf32>
      %35 = arith.addf %30, %34 : vector<1x8x128xf32>
      %c0_18 = arith.constant 0 : index
      %c0_19 = arith.constant 0 : index
      %c0_20 = arith.constant 0 : index
      %36 = vector.load %arg7[%c0_18, %c0_19, %c0_20] : memref<1x8x128xf32, #tpu.memory_space<vmem>>, vector<1x8x128xf32>
      tpu.vector_store %arg7[%c0_18, %c0_19, %c0_20], %35 {strides = array<i32>} : memref<1x8x128xf32, #tpu.memory_space<vmem>>, vector<1x8x128xf32>,
      %c0_21 = arith.constant 0 : index
      %c0_22 = arith.constant 0 : index
      %c0_23 = arith.constant 0 : index
      %37 = vector.load %arg8[%c0_21, %c0_22, %c0_23] : memref<1x8x128xf32, #tpu.memory_space<vmem>>, vector<1x8x128xf32>
      %cst_24 = arith.constant dense<0.000000e+00> : vector<128xf32>
      %38 = vector.multi_reduction <add>, %29, %cst_24 [0] : vector<32x128xf32> to vector<128xf32>
      %39 = vector.shape_cast %38 : vector<128xf32> to vector<1x128xf32>
      %40 = vector.shape_cast %39 : vector<1x128xf32> to vector<1x1x128xf32>
      %41 = vector.broadcast %40 : vector<1x1x128xf32> to vector<1x8x128xf32>
      %42 = arith.addf %37, %41 : vector<1x8x128xf32>
      %c0_25 = arith.constant 0 : index
      %c0_26 = arith.constant 0 : index
      %c0_27 = arith.constant 0 : index
      %43 = vector.load %arg8[%c0_25, %c0_26, %c0_27] : memref<1x8x128xf32, #tpu.memory_space<vmem>>, vector<1x8x128xf32>
      tpu.vector_store %arg8[%c0_25, %c0_26, %c0_27], %42 {strides = array<i32>} : memref<1x8x128xf32, #tpu.memory_space<vmem>>, vector<1x8x128xf32>,
      %c0_28 = arith.constant 0 : index
      %c0_29 = arith.constant 0 : index
      %c0_30 = arith.constant 0 : index
      %44 = vector.load %arg9[%c0_28, %c0_29, %c0_30] : memref<1x8x128xf32, #tpu.memory_space<vmem>>, vector<1x8x128xf32>
      %45 = arith.mulf %24, %24 : vector<32x128xf32>
      %46 = arith.mulf %29, %29 : vector<32x128xf32>
      %47 = arith.addf %45, %46 : vector<32x128xf32>
      %cst_31 = arith.constant dense<0.000000e+00> : vector<128xf32>
      %48 = vector.multi_reduction <add>, %47, %cst_31 [0] : vector<32x128xf32> to vector<128xf32>
      %49 = vector.shape_cast %48 : vector<128xf32> to vector<1x128xf32>
      %50 = vector.shape_cast %49 : vector<1x128xf32> to vector<1x1x128xf32>
      %51 = vector.broadcast %50 : vector<1x1x128xf32> to vector<1x8x128xf32>
      %52 = arith.addf %44, %51 : vector<1x8x128xf32>
      %c0_32 = arith.constant 0 : index
      %c0_33 = arith.constant 0 : index
      %c0_34 = arith.constant 0 : index
      %53 = vector.load %arg9[%c0_32, %c0_33, %c0_34] : memref<1x8x128xf32, #tpu.memory_space<vmem>>, vector<1x8x128xf32>
      tpu.vector_store %arg9[%c0_32, %c0_33, %c0_34], %52 {strides = array<i32>} : memref<1x8x128xf32, #tpu.memory_space<vmem>>, vector<1x8x128xf32>,
      %c0_35 = arith.constant 0 : index
      %c0_36 = arith.constant 0 : index
      %c0_37 = arith.constant 0 : index
      %54 = vector.load %arg10[%c0_35, %c0_36, %c0_37] : memref<1x8x128xf32, #tpu.memory_space<vmem>>, vector<1x8x128xf32>
      %55 = arith.mulf %24, %29 : vector<32x128xf32>
      %cst_38 = arith.constant dense<0.000000e+00> : vector<128xf32>
      %56 = vector.multi_reduction <add>, %55, %cst_38 [0] : vector<32x128xf32> to vector<128xf32>
      %57 = vector.shape_cast %56 : vector<128xf32> to vector<1x128xf32>
      %58 = vector.shape_cast %57 : vector<1x128xf32> to vector<1x1x128xf32>
      %59 = vector.broadcast %58 : vector<1x1x128xf32> to vector<1x8x128xf32>
      %60 = arith.addf %54, %59 : vector<1x8x128xf32>
      %c0_39 = arith.constant 0 : index
      %c0_40 = arith.constant 0 : index
      %c0_41 = arith.constant 0 : index
      %61 = vector.load %arg10[%c0_39, %c0_40, %c0_41] : memref<1x8x128xf32, #tpu.memory_space<vmem>>, vector<1x8x128xf32>
      tpu.vector_store %arg10[%c0_39, %c0_40, %c0_41], %60 {strides = array<i32>} : memref<1x8x128xf32, #tpu.memory_space<vmem>>, vector<1x8x128xf32>,
    } else {
    }
    return
  }
  func.func @transform_0(%arg0: i32, %arg1: i32, %arg2: i32) -> (i32, i32) {
    %c1_i32 = arith.constant 1 : i32
    %0 = arith.muli %arg0, %c1_i32 : i32
    %1 = arith.addi %0, %arg2 : i32
    %c0_i32 = arith.constant 0 : i32
    %2 = arith.minsi %1, %c0_i32 : i32
    %c0_i32_0 = arith.constant 0 : i32
    return %2, %arg1 : i32, i32
  }
  func.func @transform_1(%arg0: i32, %arg1: i32, %arg2: i32) -> (i32, i32) {
    %c1_i32 = arith.constant 1 : i32
    %0 = arith.muli %arg0, %c1_i32 : i32
    %1 = arith.addi %0, %arg2 : i32
    %c0_i32 = arith.constant 0 : i32
    %2 = arith.minsi %1, %c0_i32 : i32
    %c0_i32_0 = arith.constant 0 : i32
    return %2, %arg1 : i32, i32
  }
  func.func @transform_2(%arg0: i32, %arg1: i32, %arg2: i32) -> (i32, i32) {
    %c0_i32 = arith.constant 0 : i32
    %c0_i32_0 = arith.constant 0 : i32
    return %c0_i32, %arg1 : i32, i32
  }
  func.func @transform_3(%arg0: i32, %arg1: i32, %arg2: i32) -> (i32, i32) {
    %c0_i32 = arith.constant 0 : i32
    %c0_i32_0 = arith.constant 0 : i32
    return %c0_i32, %arg1 : i32, i32
  }
  func.func @transform_4(%arg0: i32, %arg1: i32, %arg2: i32) -> (i32, i32, i32) {
    %c0_i32 = arith.constant 0 : i32
    %c0_i32_0 = arith.constant 0 : i32
    return %arg0, %c0_i32, %arg1 : i32, i32, i32
  }
  func.func @transform_5(%arg0: i32, %arg1: i32, %arg2: i32) -> (i32, i32, i32) {
    %c0_i32 = arith.constant 0 : i32
    %c0_i32_0 = arith.constant 0 : i32
    return %arg0, %c0_i32, %arg1 : i32, i32, i32
  }
  func.func @transform_6(%arg0: i32, %arg1: i32, %arg2: i32) -> (i32, i32, i32) {
    %c0_i32 = arith.constant 0 : i32
    %c0_i32_0 = arith.constant 0 : i32
    return %arg0, %c0_i32, %arg1 : i32, i32, i32
  }
  func.func @transform_7(%arg0: i32, %arg1: i32, %arg2: i32) -> (i32, i32, i32) {
    %c0_i32 = arith.constant 0 : i32
    %c0_i32_0 = arith.constant 0 : i32
    return %arg0, %c0_i32, %arg1 : i32, i32, i32
  }
}

</mosaic_0001>

<llo_original>
// kernel: tpu_custom_call.1
$region0: #{tpu_custom_call.1}
  #allocation0 [shape = 'u32[]', space=smem, size = 0x4, offset = 0x4, fixed_abs, tag = 'smem constant byte address 0x4 - core index']
  #allocation1 [shape = 'u32[144,128]{1,0:T(1,128)}', space=vmem, size = 0x12000, scoped, tag = 'internal scratch']
  %s0 = inlined_call_operand.hbm [shape: f32[32,128], index: 0, kind: input, shape index: {}]
  %s1 = inlined_call_operand.hbm [shape: f32[32,128], index: 1, kind: input, shape index: {}]
  %s2 = inlined_call_operand.vmem [shape: f32[1,128], index: 2, kind: input, shape index: {}]
  %s3 = inlined_call_operand.vmem [shape: f32[1,128], index: 3, kind: input, shape index: {}]
  %s4 = inlined_call_operand.hbm [shape: f32[1,8,128], index: 4, kind: output, shape index: {0}]
  %s5 = inlined_call_operand.hbm [shape: f32[1,8,128], index: 5, kind: output, shape index: {1}]
  %s6 = inlined_call_operand.hbm [shape: f32[1,8,128], index: 6, kind: output, shape index: {2}]
  %s7 = inlined_call_operand.hbm [shape: f32[1,8,128], index: 7, kind: output, shape index: {3}]
  %8 = xla_tuple %s4, %s5, %s6, %s7
  %s9 = sld [smem:[#allocation0]]
  $region70: #{tpu_custom_call.1} parent=0
    _
  %s11 = ssub.s32 1, %s9
  %s12 = scalar_select 0, %s11, %s9
  $region1: #{tpu_custom_call.1} parent=0
    #allocation2 [shape = 'u8[16384]{0}', space=vmem, size = 0x4000, scoped, tag = 'input window, operand 0, single buffered']
    #allocation3 [shape = 's32[1]{0}', space=sflag, size = 0x4, scoped, tag = 'scoped memory for tpu_custom_call.1']
    #allocation4 [shape = 's32[1]{0}', space=sflag, size = 0x4, scoped, tag = 'scoped memory for tpu_custom_call.1']
    #allocation5 [shape = 'u8[16384]{0}', space=vmem, size = 0x4000, scoped, tag = 'input window, operand 1, single buffered']
    #allocation6 [shape = 's32[1]{0}', space=sflag, size = 0x4, scoped, tag = 'scoped memory for tpu_custom_call.1']
    #allocation7 [shape = 'u8[4096]{0}', space=vmem, size = 0x1000, scoped, tag = 'output window, operand 0, single buffered']
    #allocation8 [shape = 'u8[4096]{0}', space=vmem, size = 0x1000, scoped, tag = 'output window, operand 1, single buffered']
    #allocation9 [shape = 's32[1]{0}', space=sflag, size = 0x4, scoped, tag = 'scoped memory for tpu_custom_call.1']
    #allocation10 [shape = 'u8[4096]{0}', space=vmem, size = 0x1000, scoped, tag = 'output window, operand 2, single buffered']
    #allocation11 [shape = 'u8[4096]{0}', space=vmem, size = 0x1000, scoped, tag = 'output window, operand 3, single buffered']
    #allocation12 [shape = 's32[1]{0}', space=sflag, size = 0x4, scoped, tag = 'scoped memory for tpu_custom_call.1']
    %13 = vsyncpa [#allocation3], 0
    %14 = vsyncpa [#allocation6], 0
    %15 = vsyncpa [#allocation4], 0
    %16 = vsyncpa [#allocation9], 0
    %17 = vsyncpa [#allocation12], 0
    // Predicated region
    $region2: #{tpu_custom_call.1} parent=1 // pred_check
      _
    $region3: #{tpu_custom_call.1} parent=1 // pred_check_branch
      %19 = sbr.rel (0) target = $region5
    $region4: #{tpu_custom_call.1} parent=1 // pred_region
      %s20 = sadd.s32 0, 0
      %p21 = scmp.lt.s32.totalorder %s20, 0
      %s22 = scalar_select %p21, %s20, 0
      %s23 = smul.u32 4, %s22
      %s25 = ssub.s32 512, 512
      %26 = vsyncadd [#allocation3], %s25
      %s27 = smul.addr %s23, 128
      %s28 = scalar_lea.hbm %s0, %s27
      %s29 = sshll.u32 [#allocation2], 4
      %s30 = int_to_ptr.vmem [resolvable:$true] %s29
      %35 = dma.hbm_to_vmem [thread:$0]  %s28, 512, %s30, [#allocation3], 128, 128, 8
    $region5: #{tpu_custom_call.1} parent=1 // pred_fallthru
      _
    // Predicated region
    $region6: #{tpu_custom_call.1} parent=1 // pred_check
      _
    $region7: #{tpu_custom_call.1} parent=1 // pred_check_branch
      %37 = sbr.rel (0) target = $region9
    $region8: #{tpu_custom_call.1} parent=1 // pred_region
      %s38 = sadd.s32 0, 0
      %p39 = scmp.lt.s32.totalorder %s38, 0
      %s40 = scalar_select %p39, %s38, 0
      %s41 = smul.u32 4, %s40
      %s43 = ssub.s32 512, 512
      %44 = vsyncadd [#allocation6], %s43
      %s45 = smul.addr %s41, 128
      %s46 = scalar_lea.hbm %s1, %s45
      %s47 = sshll.u32 [#allocation5], 4
      %s48 = int_to_ptr.vmem [resolvable:$true] %s47
      %53 = dma.hbm_to_vmem [thread:$0]  %s46, 512, %s48, [#allocation6], 128, 128, 8
    $region9: #{tpu_custom_call.1} parent=1 // pred_fallthru
      _
    // Predicated region
    $region10: #{tpu_custom_call.1} parent=1 // pred_check
      _
    $region11: #{tpu_custom_call.1} parent=1 // pred_check_branch
      %55 = sbr.rel (0) target = $region13
    $region12: #{tpu_custom_call.1} parent=1 // pred_region
      _
    $region13: #{tpu_custom_call.1} parent=1 // pred_fallthru
      _
    // Predicated region
    $region14: #{tpu_custom_call.1} parent=1 // pred_check
      _
    $region15: #{tpu_custom_call.1} parent=1 // pred_check_branch
      %57 = sbr.rel (0) target = $region17
    $region16: #{tpu_custom_call.1} parent=1 // pred_region
      _
    $region17: #{tpu_custom_call.1} parent=1 // pred_fallthru
      _
    // Predicated region
    $region18: #{tpu_custom_call.1} parent=1 // pred_check
      _
    $region19: #{tpu_custom_call.1} parent=1 // pred_check_branch
      %59 = sbr.rel (0) target = $region21
    $region20: #{tpu_custom_call.1} parent=1 // pred_region
      %60 = dma.done [#allocation3], 512
    $region21: #{tpu_custom_call.1} parent=1 // pred_fallthru
      _
    // Predicated region
    $region22: #{tpu_custom_call.1} parent=1 // pred_check
      _
    $region23: #{tpu_custom_call.1} parent=1 // pred_check_branch
      %62 = sbr.rel (0) target = $region25
    $region24: #{tpu_custom_call.1} parent=1 // pred_region
      %63 = dma.done [#allocation6], 512
    $region25: #{tpu_custom_call.1} parent=1 // pred_fallthru
      _
    %s64 = sadd.s32 0, 0
    %p65 = scmp.lt.s32.totalorder %s64, 0
    %s66 = scalar_select %p65, %s64, 0
    %s67 = smul.u32 4, %s66
    %s68 = sadd.s32 0, 0
    %p69 = scmp.lt.s32.totalorder %s68, 0
    %s70 = scalar_select %p69, %s68, 0
    %s71 = smul.u32 4, %s70
    %p72 = scmp.eq.s32.totalorder 0, 0
    // Predicated region
    $region26: #{tpu_custom_call.1} parent=1 // pred_check
      %p73 = pneg %p72
    $region27: #{tpu_custom_call.1} parent=1 // pred_check_branch
      %75 = sbr.rel (%p73) target = $region29
    $region28: #{tpu_custom_call.1} parent=1 // pred_region
      %76 = vst [vmem:[#allocation7] sm:$0xff] 0.0
      %77 = vst [vmem:[#allocation8] sm:$0xff] 0.0
      %78 = vst [vmem:[#allocation10] sm:$0xff] 0.0
      %79 = vst [vmem:[#allocation11] sm:$0xff] 0.0
    $region29: #{tpu_custom_call.1} parent=1 // pred_fallthru
      _
    %v80 = vld [vmem:[%s2] sm:$0x1]
    %v81 = vld [vmem:[%s3] sm:$0x1]
    %s82 = sadd.s32 0, 0
    %s83 = smul.u32 %s82, 32
    %s84 = sadd.s32 %s83, 32
    %p85 = scmp.le.s32.totalorder %s84, 32
    // Predicated region
    $region30: #{tpu_custom_call.1} parent=1 // pred_check
      %p86 = pneg %p85
    $region31: #{tpu_custom_call.1} parent=1 // pred_check_branch
      %88 = sbr.rel (%p86) target = $region33
    $region32: #{tpu_custom_call.1} parent=1 // pred_region
      %v89 = vld [vmem:[#allocation2] sm:$0xff]
      %v90 = vld [vmem:[#allocation2 + $0x8] sm:$0xff]
      %v91 = vld [vmem:[#allocation2 + $0x10] sm:$0xff]
      %v92 = vld [vmem:[#allocation2 + $0x18] sm:$0xff]
      %v94 = vlaneseq
      %v95 = vshrl.u32 %v94, 7
      %v96 = vsub.s32 0, %v95
      %v97 = vrot.slane %v80, %v96
      %v99 = vsub.f32 %v89, %v97
      %v100 = vsub.f32 %v90, %v97
      %v101 = vsub.f32 %v91, %v97
      %v102 = vsub.f32 %v92, %v97
      %v103 = vld [vmem:[#allocation5] sm:$0xff]
      %v104 = vld [vmem:[#allocation5 + $0x8] sm:$0xff]
      %v105 = vld [vmem:[#allocation5 + $0x10] sm:$0xff]
      %v106 = vld [vmem:[#allocation5 + $0x18] sm:$0xff]
      %v108 = vlaneseq
      %v109 = vshrl.u32 %v108, 7
      %v110 = vsub.s32 0, %v109
      %v111 = vrot.slane %v81, %v110
      %v113 = vsub.f32 %v103, %v111
      %v114 = vsub.f32 %v104, %v111
      %v115 = vsub.f32 %v105, %v111
      %v116 = vsub.f32 %v106, %v111
      %v117 = vld [vmem:[#allocation7] sm:$0xff]
      %v118 = vadd.f32 %v99, %v100
      %v119 = vadd.f32 %v118, %v101
      %v120 = vadd.f32 %v119, %v102
      %v121 = vrot.slane %v120, 4
      %v122 = vadd.f32 %v120, %v121
      %v123 = vrot.slane %v122, 2
      %v124 = vadd.f32 %v122, %v123
      %v125 = vrot.slane %v124, 1
      %v126 = vadd.f32 %v124, %v125
      %v127 = vadd.f32 %v117, %v126
      %128 = vst [vmem:[#allocation7] sm:$0xff] %v127
      %v129 = vld [vmem:[#allocation8] sm:$0xff]
      %v130 = vadd.f32 %v113, %v114
      %v131 = vadd.f32 %v130, %v115
      %v132 = vadd.f32 %v131, %v116
      %v133 = vrot.slane %v132, 4
      %v134 = vadd.f32 %v132, %v133
      %v135 = vrot.slane %v134, 2
      %v136 = vadd.f32 %v134, %v135
      %v137 = vrot.slane %v136, 1
      %v138 = vadd.f32 %v136, %v137
      %v139 = vadd.f32 %v129, %v138
      %140 = vst [vmem:[#allocation8] sm:$0xff] %v139
      %v141 = vld [vmem:[#allocation10] sm:$0xff]
      %v142 = vmul.f32 %v99, %v99
      %v143 = vmul.f32 %v100, %v100
      %v144 = vmul.f32 %v101, %v101
      %v145 = vmul.f32 %v102, %v102
      %v146 = vmul.f32 %v113, %v113
      %v147 = vmul.f32 %v114, %v114
      %v148 = vmul.f32 %v115, %v115
      %v149 = vmul.f32 %v116, %v116
      %v150 = vadd.f32 %v142, %v146
      %v151 = vadd.f32 %v143, %v147
      %v152 = vadd.f32 %v144, %v148
      %v153 = vadd.f32 %v145, %v149
      %v154 = vadd.f32 %v150, %v151
      %v155 = vadd.f32 %v154, %v152
      %v156 = vadd.f32 %v155, %v153
      %v157 = vrot.slane %v156, 4
      %v158 = vadd.f32 %v156, %v157
      %v159 = vrot.slane %v158, 2
      %v160 = vadd.f32 %v158, %v159
      %v161 = vrot.slane %v160, 1
      %v162 = vadd.f32 %v160, %v161
      %v163 = vadd.f32 %v141, %v162
      %164 = vst [vmem:[#allocation10] sm:$0xff] %v163
      %v165 = vld [vmem:[#allocation11] sm:$0xff]
      %v166 = vmul.f32 %v99, %v113
      %v167 = vmul.f32 %v100, %v114
      %v168 = vmul.f32 %v101, %v115
      %v169 = vmul.f32 %v102, %v116
      %v170 = vadd.f32 %v166, %v167
      %v171 = vadd.f32 %v170, %v168
      %v172 = vadd.f32 %v171, %v169
      %v173 = vrot.slane %v172, 4
      %v174 = vadd.f32 %v172, %v173
      %v175 = vrot.slane %v174, 2
      %v176 = vadd.f32 %v174, %v175
      %v177 = vrot.slane %v176, 1
      %v178 = vadd.f32 %v176, %v177
      %v179 = vadd.f32 %v165, %v178
      %180 = vst [vmem:[#allocation11] sm:$0xff] %v179
    $region33: #{tpu_custom_call.1} parent=1 // pred_fallthru
      _
    %p181 = scmp.gt.s32.totalorder %s84, 32
    // Predicated region
    $region34: #{tpu_custom_call.1} parent=1 // pred_check
      %p182 = pneg %p181
    $region35: #{tpu_custom_call.1} parent=1 // pred_check_branch
      %184 = sbr.rel (%p182) target = $region37
    $region36: #{tpu_custom_call.1} parent=1 // pred_region
      %v185 = vlaneseq
      %v186 = vshrl.u32 %v185, 7
      %v187 = vadd.s32 %v186, 8
      %v188 = vadd.s32 %v186, 16
      %v189 = vadd.s32 %v186, 24
      %v190 = vstv %s83
      %v191 = vadd.s32 %v186, %v190
      %v192 = vadd.s32 %v187, %v190
      %v193 = vadd.s32 %v188, %v190
      %v194 = vadd.s32 %v189, %v190
      %vm195 = vcmp.lt.s32.totalorder %v191, 32
      %vm196 = vcmp.lt.s32.totalorder %v192, 32
      %vm197 = vcmp.lt.s32.totalorder %v193, 32
      %vm198 = vcmp.lt.s32.totalorder %v194, 32
      %v199 = vld [vmem:[#allocation2] sm:$0xff]
      %v200 = vld [vmem:[#allocation2 + $0x8] sm:$0xff]
      %v201 = vld [vmem:[#allocation2 + $0x10] sm:$0xff]
      %v202 = vld [vmem:[#allocation2 + $0x18] sm:$0xff]
      %v204 = vlaneseq
      %v205 = vshrl.u32 %v204, 7
      %v206 = vsub.s32 0, %v205
      %v207 = vrot.slane %v80, %v206
      %v209 = vsub.f32 %v199, %v207
      %v210 = vsub.f32 %v200, %v207
      %v211 = vsub.f32 %v201, %v207
      %v212 = vsub.f32 %v202, %v207
      %v213 = vsel %vm195, %v209, 0.0
      %v214 = vsel %vm196, %v210, 0.0
      %v215 = vsel %vm197, %v211, 0.0
      %v216 = vsel %vm198, %v212, 0.0
      %v217 = vld [vmem:[#allocation5] sm:$0xff]
      %v218 = vld [vmem:[#allocation5 + $0x8] sm:$0xff]
      %v219 = vld [vmem:[#allocation5 + $0x10] sm:$0xff]
      %v220 = vld [vmem:[#allocation5 + $0x18] sm:$0xff]
      %v222 = vlaneseq
      %v223 = vshrl.u32 %v222, 7
      %v224 = vsub.s32 0, %v223
      %v225 = vrot.slane %v81, %v224
      %v227 = vsub.f32 %v217, %v225
      %v228 = vsub.f32 %v218, %v225
      %v229 = vsub.f32 %v219, %v225
      %v230 = vsub.f32 %v220, %v225
      %v231 = vsel %vm195, %v227, 0.0
      %v232 = vsel %vm196, %v228, 0.0
      %v233 = vsel %vm197, %v229, 0.0
      %v234 = vsel %vm198, %v230, 0.0
      %v235 = vld [vmem:[#allocation7] sm:$0xff]
      %v236 = vadd.f32 %v213, %v214
      %v237 = vadd.f32 %v236, %v215
      %v238 = vadd.f32 %v237, %v216
      %v239 = vrot.slane %v238, 4
      %v240 = vadd.f32 %v238, %v239
      %v241 = vrot.slane %v240, 2
      %v242 = vadd.f32 %v240, %v241
      %v243 = vrot.slane %v242, 1
      %v244 = vadd.f32 %v242, %v243
      %v245 = vadd.f32 %v235, %v244
      %246 = vst [vmem:[#allocation7] sm:$0xff] %v245
      %v247 = vld [vmem:[#allocation8] sm:$0xff]
      %v248 = vadd.f32 %v231, %v232
      %v249 = vadd.f32 %v248, %v233
      %v250 = vadd.f32 %v249, %v234
      %v251 = vrot.slane %v250, 4
      %v252 = vadd.f32 %v250, %v251
      %v253 = vrot.slane %v252, 2
      %v254 = vadd.f32 %v252, %v253
      %v255 = vrot.slane %v254, 1
      %v256 = vadd.f32 %v254, %v255
      %v257 = vadd.f32 %v247, %v256
      %258 = vst [vmem:[#allocation8] sm:$0xff] %v257
      %v259 = vld [vmem:[#allocation10] sm:$0xff]
      %v260 = vmul.f32 %v213, %v213
      %v261 = vmul.f32 %v214, %v214
      %v262 = vmul.f32 %v215, %v215
      %v263 = vmul.f32 %v216, %v216
      %v264 = vmul.f32 %v231, %v231
      %v265 = vmul.f32 %v232, %v232
      %v266 = vmul.f32 %v233, %v233
      %v267 = vmul.f32 %v234, %v234
      %v268 = vadd.f32 %v260, %v264
      %v269 = vadd.f32 %v261, %v265
      %v270 = vadd.f32 %v262, %v266
      %v271 = vadd.f32 %v263, %v267
      %v272 = vadd.f32 %v268, %v269
      %v273 = vadd.f32 %v272, %v270
      %v274 = vadd.f32 %v273, %v271
      %v275 = vrot.slane %v274, 4
      %v276 = vadd.f32 %v274, %v275
      %v277 = vrot.slane %v276, 2
      %v278 = vadd.f32 %v276, %v277
      %v279 = vrot.slane %v278, 1
      %v280 = vadd.f32 %v278, %v279
      %v281 = vadd.f32 %v259, %v280
      %282 = vst [vmem:[#allocation10] sm:$0xff] %v281
      %v283 = vld [vmem:[#allocation11] sm:$0xff]
      %v284 = vmul.f32 %v213, %v231
      %v285 = vmul.f32 %v214, %v232
      %v286 = vmul.f32 %v215, %v233
      %v287 = vmul.f32 %v216, %v234
      %v288 = vadd.f32 %v284, %v285
      %v289 = vadd.f32 %v288, %v286
      %v290 = vadd.f32 %v289, %v287
      %v291 = vrot.slane %v290, 4
      %v292 = vadd.f32 %v290, %v291
      %v293 = vrot.slane %v292, 2
      %v294 = vadd.f32 %v292, %v293
      %v295 = vrot.slane %v294, 1
      %v296 = vadd.f32 %v294, %v295
      %v297 = vadd.f32 %v283, %v296
      %298 = vst [vmem:[#allocation11] sm:$0xff] %v297
    $region37: #{tpu_custom_call.1} parent=1 // pred_fallthru
      _
    // Predicated region
    $region38: #{tpu_custom_call.1} parent=1 // pred_check
      _
    $region39: #{tpu_custom_call.1} parent=1 // pred_check_branch
      %300 = sbr.rel (0) target = $region41
    $region40: #{tpu_custom_call.1} parent=1 // pred_region
      %s302 = ssub.s32 128, 128
      %303 = vsyncadd [#allocation4], %s302
      %s305 = sshll.u32 [#allocation7], 4
      %s306 = int_to_ptr.vmem [resolvable:$true] %s305
      %308 = dma.vmem_to_hbm [thread:$0]  %s306, 128, %s4, [#allocation4]
    $region41: #{tpu_custom_call.1} parent=1 // pred_fallthru
      _
    // Predicated region
    $region42: #{tpu_custom_call.1} parent=1 // pred_check
      _
    $region43: #{tpu_custom_call.1} parent=1 // pred_check_branch
      %310 = sbr.rel (0) target = $region45
    $region44: #{tpu_custom_call.1} parent=1 // pred_region
      %s312 = ssub.s32 128, 128
      %313 = vsyncadd [#allocation9], %s312
      %s315 = sshll.u32 [#allocation8], 4
      %s316 = int_to_ptr.vmem [resolvable:$true] %s315
      %318 = dma.vmem_to_hbm [thread:$0]  %s316, 128, %s5, [#allocation9]
    $region45: #{tpu_custom_call.1} parent=1 // pred_fallthru
      _
    // Predicated region
    $region46: #{tpu_custom_call.1} parent=1 // pred_check
      _
    $region47: #{tpu_custom_call.1} parent=1 // pred_check_branch
      %320 = sbr.rel (0) target = $region49
    $region48: #{tpu_custom_call.1} parent=1 // pred_region
      %s322 = ssub.s32 128, 128
      %323 = vsyncadd [#allocation9], %s322
      %s325 = sshll.u32 [#allocation10], 4
      %s326 = int_to_ptr.vmem [resolvable:$true] %s325
      %328 = dma.vmem_to_hbm [thread:$0]  %s326, 128, %s6, [#allocation9]
    $region49: #{tpu_custom_call.1} parent=1 // pred_fallthru
      _
    // Predicated region
    $region50: #{tpu_custom_call.1} parent=1 // pred_check
      _
    $region51: #{tpu_custom_call.1} parent=1 // pred_check_branch
      %330 = sbr.rel (0) target = $region53
    $region52: #{tpu_custom_call.1} parent=1 // pred_region
      %s332 = ssub.s32 128, 128
      %333 = vsyncadd [#allocation12], %s332
      %s335 = sshll.u32 [#allocation11], 4
      %s336 = int_to_ptr.vmem [resolvable:$true] %s335
      %338 = dma.vmem_to_hbm [thread:$0]  %s336, 128, %s7, [#allocation12]
    $region53: #{tpu_custom_call.1} parent=1 // pred_fallthru
      _
    // Predicated region
    $region54: #{tpu_custom_call.1} parent=1 // pred_check
      _
    $region55: #{tpu_custom_call.1} parent=1 // pred_check_branch
      %340 = sbr.rel (0) target = $region57
    $region56: #{tpu_custom_call.1} parent=1 // pred_region
      %341 = dma.done [#allocation4], 128
    $region57: #{tpu_custom_call.1} parent=1 // pred_fallthru
      _
    // Predicated region
    $region58: #{tpu_custom_call.1} parent=1 // pred_check
      _
    $region59: #{tpu_custom_call.1} parent=1 // pred_check_branch
      %343 = sbr.rel (0) target = $region61
    $region60: #{tpu_custom_call.1} parent=1 // pred_region
      %344 = dma.done [#allocation9], 128
    $region61: #{tpu_custom_call.1} parent=1 // pred_fallthru
      _
    // Predicated region
    $region62: #{tpu_custom_call.1} parent=1 // pred_check
      _
    $region63: #{tpu_custom_call.1} parent=1 // pred_check_branch
      %346 = sbr.rel (0) target = $region65
    $region64: #{tpu_custom_call.1} parent=1 // pred_region
      %347 = dma.done [#allocation9], 128
    $region65: #{tpu_custom_call.1} parent=1 // pred_fallthru
      _
    // Predicated region
    $region66: #{tpu_custom_call.1} parent=1 // pred_check
      _
    $region67: #{tpu_custom_call.1} parent=1 // pred_check_branch
      %349 = sbr.rel (0) target = $region69
    $region68: #{tpu_custom_call.1} parent=1 // pred_region
      %350 = dma.done [#allocation12], 128
    $region69: #{tpu_custom_call.1} parent=1 // pred_fallthru
      _
    %351 = vsyncpa [#allocation3], 1
    %352 = vsyncpa [#allocation6], 1
    %353 = vsyncpa [#allocation4], 1
    %354 = vsyncpa [#allocation9], 1
    %355 = vsyncpa [#allocation12], 1

</llo_original>
